<compile_context>
chip_gen: v5e
topology: v5e:2x2
jax: 0.10.0
libtpu: 0.0.40
codegen_flags: <defaults>
</compile_context>

<pallas_src>
import jax
import jax.numpy as jnp
import numpy as np
from jax.experimental import pallas as pl
from jax.experimental.pallas import tpu as pltpu


def _hbm_copy_kernel(x_hbm, o_hbm, sem):
    # Whole-array HBM -> HBM DMA.  The row-major flat layout of (C*H*W,) is
    # bit-identical to (C, H, W), so an exact copy reproduces torch .view().
    cp = pltpu.make_async_copy(x_hbm, o_hbm, sem)
    cp.start()
    cp.wait()


def _pallas_identity_copy(x):
    """Materialize a copy of `x` via a single HBM->HBM DMA (no VMEM staging)."""
    itemsize = np.dtype(x.dtype).itemsize
    total_bytes = int(np.prod(x.shape)) * itemsize
    return pl.pallas_call(
        _hbm_copy_kernel,
        out_shape=jax.ShapeDtypeStruct(x.shape, x.dtype),
        in_specs=[pl.BlockSpec(memory_space=pl.ANY)],
        out_specs=pl.BlockSpec(memory_space=pl.ANY),
        scratch_shapes=[pltpu.SemaphoreType.DMA],
        cost_estimate=pl.CostEstimate(
            flops=0, transcendentals=0, bytes_accessed=2 * total_bytes
        ),
    )(x)


def unflatten(x, C=128, H=7, W=7, *, use_pallas_copy=False):
    """x: (N, C*H*W) -> (N, C, H, W), same dtype.  Matches torch .view()."""
    N, F = x.shape
    assert F == C * H * W, f"expected last dim {C * H * W}, got {F}"

    if not use_pallas_copy:
        # Fastest path (and the only production path): pure metadata reshape.
        return x.reshape(N, C, H, W)

    # Validation / "must materialize a new buffer" path: one HBM->HBM DMA,
    # then a metadata-only reshape of the copy.
    flat = _pallas_identity_copy(x)
    return flat.reshape(N, C, H, W)


if __name__ == "__main__":
    # Small shapes consistent with the module: N=2, C=4, spatial 16x16.
    N, C, H, W = 2, 4, 16, 16
    key = jax.random.PRNGKey(0)
    x = jax.random.normal(key, (N, C * H * W), dtype=jnp.float32)

    # Reference semantics: plain reshape (== torch .view).
    y_ref = x.reshape(N, C, H, W)

    # Default (kernel-free) path.
    y_fast = jax.block_until_ready(unflatten(x, C=C, H=H, W=W))

    # Pallas DMA-copy path — exercised once to validate the kernel.
    y_kernel = jax.block_until_ready(
        unflatten(x, C=C, H=H, W=W, use_pallas_copy=True)
    )

    assert y_fast.shape == (N, C, H, W) and y_kernel.shape == (N, C, H, W)
    assert y_fast.dtype == x.dtype and y_kernel.dtype == x.dtype
    assert jnp.array_equal(y_fast, y_ref)
    assert jnp.array_equal(y_kernel, y_ref)

    print("KERNEL_OK")
</pallas_src>

<mosaic_0001>
module attributes {stable_mosaic.version = 11 : i64} {
  func.func @_hbm_copy_kernel(%arg0: memref<2x1024xf32, #tpu.memory_space<any>>, %arg1: memref<2x1024xf32, #tpu.memory_space<any>>, %arg2: memref<!tpu.dma_semaphore, #tpu.memory_space<semaphore_mem>>) attributes {dimension_semantics = [], scalar_prefetch = 0 : i64, scratch_operands = 1 : i64, tpu.core_type = #tpu.core_type<tc>} {
    tpu.enqueue_dma source(%arg0 : memref<2x1024xf32, #tpu.memory_space<any>>) target(%arg1 : memref<2x1024xf32, #tpu.memory_space<any>>) target_semaphore(%arg2 : memref<!tpu.dma_semaphore, #tpu.memory_space<semaphore_mem>>)
    tpu.wait_dma2 semaphore(%arg2 : memref<!tpu.dma_semaphore, #tpu.memory_space<semaphore_mem>>) src(%arg0 : memref<2x1024xf32, #tpu.memory_space<any>>) dst(%arg1 : memref<2x1024xf32, #tpu.memory_space<any>>)
    return
  }
}

</mosaic_0001>

<llo_original>
// kernel: tpu_custom_call.1
$region0: #{tpu_custom_call.1}
  #allocation0 [shape = 'u32[]', space=smem, size = 0x4, offset = 0x4, fixed_abs, tag = 'smem constant byte address 0x4 - core index']
  #allocation1 [shape = 'u32[72,128]{1,0:T(1,128)}', space=vmem, size = 0x9000, scoped, tag = 'internal scratch']
  #allocation2 [shape = 's32[1]{0}', space=sflag, size = 0x4, scoped, tag = 'scratch operand']
  #allocation3 [shape = 's32[]', space=sflag, size = 0x4, offset = 0, fixed_abs, tag = 'sflag constant byte address 0x0 - dummy sync flag']
  #allocation4 [shape = 'u32[0]{0}', space=smem, size = 0, offset = 0, fixed_abs, tag = 'smem constant byte address 0x0 - null']
  %s0 = inlined_call_operand.hbm [shape: f32[2,1024], index: 0, kind: input, shape index: {}]
  %s1 = inlined_call_operand.hbm [shape: f32[2,1024], index: 1, kind: output, shape index: {}]
  %s2 = sld [smem:[#allocation0]]
  $region2: #{tpu_custom_call.1} parent=0
    _
  %s4 = ssub.s32 1, %s2
  %s5 = scalar_select 0, %s4, %s2
  %s7 = sshll.u32 1, 14
  %s8 = sxor.u32 4294967295, %s7
  %s10 = sshll.u32 %s0, 4
  %s11 = int_to_ptr.hbm [resolvable:$true] %s10
  %s12 = sshll.u32 %s1, 4
  %s13 = int_to_ptr.hbm [resolvable:$true] %s12
  %16 = dma.general %s11, 256, %s13, [#allocation2], [#allocation3], [#allocation4], 0, 0
  %s17 = smul.u32 2, 1
  %s18 = smul.u32 %s17, 8
  %s19 = sshll.u32 %s18, 4
  %20 = dma.done [#allocation2], %s19
  %21 = vsyncmov [#allocation2]
  %s22 = vpop.sfrf %21
  %p23 = scmp.eq.s32.totalorder %s22, 0
  %p24 = pneg %p23
  %26 = shalt.err (%p24)

</llo_original>
